<compile_context>
chip_gen: v6e
topology: v6e:2x2x1
jax: 0.10.0
libtpu: 0.0.40
codegen_flags: <defaults>
</compile_context>

<pallas_src>
import math

import jax
import jax.numpy as jnp
from jax.experimental import pallas as pl
from jax.experimental.pallas import tpu as pltpu

_MIB = 1024 * 1024


def _layer_scale_kernel(x_ref, g_ref, o_ref):
    # x_ref: (TILE_ROWS, W) tile; g_ref: (1, W) VMEM-resident fp32 gamma row.
    # Broadcasted multiply on the VPU in fp32; only the product is cast.
    o_ref[...] = (x_ref[...] * g_ref[...]).astype(o_ref.dtype)


def _generation_params():
    """Returns (target tile bytes for x, vmem_limit_bytes, try core-parallel?)."""
    kind = ""
    try:
        kind = jax.devices()[0].device_kind.lower()
    except Exception:
        pass
    if "v5 lite" in kind or "v5e" in kind or "v5litepod" in kind:
        # v5e: ~0.8 TB/s HBM, 16 MiB default scoped VMEM.
        target, limit, core_par = 4 * _MIB, 24 * _MIB, False
    elif "v7" in kind:
        # v7x: 3.2 TB/s HBM but only 64 MiB VMEM/TC and 2 TCs per chip.
        # 8 MiB tiles -> 32 MiB of in+out double buffers + tiny gamma row.
        target, limit, core_par = 8 * _MIB, 40 * _MIB, True
    else:
        # v6e / v4 / v5p: 128 MiB VMEM, 32 MiB default scoped.
        target, limit, core_par = 8 * _MIB, 40 * _MIB, False
    # Never request more than ~62% of physical VMEM (leaves compiler headroom).
    try:
        cap = getattr(pltpu.get_tpu_info(), "vmem_capacity_bytes", None)
        if cap:
            limit = min(limit, int(cap * 0.625))
    except Exception:
        pass
    return target, limit, core_par


def _choose_tile_rows(rows: int, lane_width: int, itemsize: int, target_bytes: int) -> int:
    """Largest sublane-aligned row tile targeting ~target_bytes of x per tile."""
    sub = max(8, 32 // itemsize)  # 8 for fp32, 16 for bf16, 32 for int8/fp8
    t = max(sub, (target_bytes // (lane_width * itemsize)) // sub * sub)
    if t >= rows:
        # Single block covering the whole row axis: block == full array dim,
        # so the (8, 128) divisibility rule is waived.
        return rows
    return t


def _fold_factor(dim: int, rows: int) -> int:
    """Fold rows into the lane axis so the block lane width is a multiple of 128."""
    if dim % 128 == 0:
        return 1
    fold = math.lcm(dim, 128) // dim  # 32->4, 64->2, 96->4, 160->4, 192->2, ...
    if rows % fold == 0:
        return fold
    # Ragged row count: fall back to the un-folded (possibly masked-store) path
    # rather than paying an extra HBM round trip for padding.
    return 1


def layer_scale(x: jax.Array, gamma: jax.Array, *, donate_x: bool = False) -> jax.Array:
    """x: (..., dim); gamma: (dim,). Returns x * gamma (same shape/dtype as x)."""
    orig_shape = x.shape
    dim = orig_shape[-1]
    assert gamma.shape == (dim,)

    rows = 1
    for s in orig_shape[:-1]:
        rows *= s

    target_bytes, vmem_limit, try_core_parallel = _generation_params()

    fold = _fold_factor(dim, rows)
    rows_eff = rows // fold
    width = dim * fold

    x2d = x.reshape(rows_eff, width)
    # fp32 gamma tiled to the folded lane width; constant index_map keeps it
    # VMEM-resident across all grid steps.
    g_row = jnp.tile(gamma.astype(jnp.float32), fold).reshape(1, width)

    itemsize = jnp.dtype(x.dtype).itemsize
    tile_rows = _choose_tile_rows(rows_eff, width, itemsize, target_bytes)
    grid = (pl.cdiv(rows_eff, tile_rows),)

    def _call(dim_semantics):
        return pl.pallas_call(
            _layer_scale_kernel,
            out_shape=jax.ShapeDtypeStruct((rows_eff, width), x.dtype),
            grid_spec=pltpu.PrefetchScalarGridSpec(
                num_scalar_prefetch=0,
                grid=grid,
                in_specs=[
                    pl.BlockSpec((tile_rows, width), lambda i: (i, 0)),
                    pl.BlockSpec((1, width), lambda i: (0, 0)),  # gamma: resident
                ],
                out_specs=pl.BlockSpec((tile_rows, width), lambda i: (i, 0)),
            ),
            compiler_params=pltpu.CompilerParams(
                dimension_semantics=dim_semantics,
                vmem_limit_bytes=vmem_limit,
            ),
            input_output_aliases=({0: 0} if donate_x else {}),
        )(x2d, g_row)

    # On v7x, shard the row-tile axis across both TensorCores; fall back to
    # plain "parallel" if CORE_PARALLEL is rejected on this chip/toolchain.
    semantics_candidates = []
    if try_core_parallel:
        semantics_candidates.append((pltpu.CORE_PARALLEL,))
    semantics_candidates.append(("parallel",))

    out = None
    last_err = None
    for sem in semantics_candidates:
        try:
            out = _call(sem)
            break
        except Exception as e:  # retry with the portable semantics
            last_err = e
    if out is None:
        raise last_err

    return out.reshape(orig_shape)


if __name__ == "__main__":
    key = jax.random.PRNGKey(0)

    # Case 1: LayerScale(dim=32, init_values=1e-5), fp32 tokens (batch=2, seq=8).
    dim = 32
    init_values = 1e-5
    gamma = init_values * jnp.ones((dim,), dtype=jnp.float32)
    x = jax.random.normal(key, (2, 8, dim), dtype=jnp.float32)
    y = layer_scale(x, gamma)
    jax.block_until_ready(y)
    assert y.shape == x.shape and y.dtype == x.dtype
    assert jnp.allclose(y, x * gamma, rtol=1e-6, atol=1e-6)

    # Case 2: dim=192 bf16 — exercises the lcm-based lane fold (192 -> width 384).
    k1, k2 = jax.random.split(key)
    dim2 = 192
    gamma2 = init_values * jnp.ones((dim2,), dtype=jnp.float32)
    x2 = jax.random.normal(k1, (2, 16, dim2), dtype=jnp.bfloat16)
    y2 = layer_scale(x2, gamma2)
    jax.block_until_ready(y2)
    ref2 = (x2.astype(jnp.float32) * gamma2).astype(jnp.bfloat16)
    assert y2.shape == x2.shape and y2.dtype == x2.dtype
    assert jnp.allclose(y2.astype(jnp.float32), ref2.astype(jnp.float32),
                        rtol=1e-2, atol=1e-7)

    # Case 3: ragged row count (rows % fold != 0) -> un-folded fallback path.
    x3 = jax.random.normal(k2, (2, 7, dim), dtype=jnp.float32)
    y3 = layer_scale(x3, gamma)
    jax.block_until_ready(y3)
    assert jnp.allclose(y3, x3 * gamma, rtol=1e-6, atol=1e-6)

    print("KERNEL_OK")
</pallas_src>

<mosaic_0001>
module attributes {stable_mosaic.version = 11 : i64} {
  func.func @_layer_scale_kernel(%arg0: i32, %arg1: memref<4x128xf32, #tpu.memory_space<vmem>>, %arg2: memref<1x128xf32, #tpu.memory_space<vmem>>, %arg3: memref<4x128xf32, #tpu.memory_space<vmem>>) attributes {dimension_semantics = [#tpu.dimension_semantics<parallel>], iteration_bounds = array<i64: 1>, scalar_prefetch = 0 : i64, scratch_operands = 0 : i64, tpu.core_type = #tpu.core_type<tc>, window_params = [{transform_indices = @transform_0, window_bounds = array<i64: 4, 128>}, {pipeline_mode = #tpu.pipeline_mode<synchronous>, transform_indices = @transform_1, window_bounds = array<i64: 1, 128>}, {transform_indices = @transform_2, window_bounds = array<i64: 4, 128>}]} {
    %c0 = arith.constant 0 : index
    %c0_0 = arith.constant 0 : index
    %0 = vector.load %arg1[%c0, %c0_0] : memref<4x128xf32, #tpu.memory_space<vmem>>, vector<4x128xf32>
    %c0_1 = arith.constant 0 : index
    %c0_2 = arith.constant 0 : index
    %1 = vector.load %arg2[%c0_1, %c0_2] : memref<1x128xf32, #tpu.memory_space<vmem>>, vector<1x128xf32>
    %2 = vector.broadcast %1 : vector<1x128xf32> to vector<4x128xf32>
    %3 = arith.mulf %0, %2 : vector<4x128xf32>
    %c0_3 = arith.constant 0 : index
    %c0_4 = arith.constant 0 : index
    %4 = vector.load %arg3[%c0_3, %c0_4] : memref<4x128xf32, #tpu.memory_space<vmem>>, vector<4x128xf32>
    tpu.vector_store %arg3[%c0_3, %c0_4], %3 {strides = array<i32>} : memref<4x128xf32, #tpu.memory_space<vmem>>, vector<4x128xf32>,
    return
  }
  func.func @transform_0(%arg0: i32) -> (i32, i32) {
    %c0_i32 = arith.constant 0 : i32
    %c0_i32_0 = arith.constant 0 : i32
    return %arg0, %c0_i32 : i32, i32
  }
  func.func @transform_1(%arg0: i32) -> (i32, i32) {
    %c0_i32 = arith.constant 0 : i32
    %c0_i32_0 = arith.constant 0 : i32
    %c0_i32_1 = arith.constant 0 : i32
    return %c0_i32, %c0_i32_0 : i32, i32
  }
  func.func @transform_2(%arg0: i32) -> (i32, i32) {
    %c0_i32 = arith.constant 0 : i32
    %c0_i32_0 = arith.constant 0 : i32
    return %arg0, %c0_i32 : i32, i32
  }
}

</mosaic_0001>

<llo_original>
// kernel: tpu_custom_call.1
$region0: #{tpu_custom_call.1}
  #allocation0 [shape = 'u32[]', space=smem, size = 0x4, offset = 0x4, fixed_abs, tag = 'smem constant byte address 0x4 - core index']
  #allocation1 [shape = 'u32[144,128]{1,0:T(1,128)}', space=vmem, size = 0x12000, scoped, tag = 'internal scratch']
  %s0 = inlined_call_operand.hbm [shape: f32[4,128], index: 0, kind: input, shape index: {}]
  %s1 = inlined_call_operand.vmem [shape: f32[1,128], index: 1, kind: input, shape index: {}]
  %s2 = inlined_call_operand.hbm [shape: f32[4,128], index: 2, kind: output, shape index: {}]
  %s3 = sld [smem:[#allocation0]]
  $region22: #{tpu_custom_call.1} parent=0
    _
  %s5 = ssub.s32 1, %s3
  %s6 = scalar_select 0, %s5, %s3
  $region1: #{tpu_custom_call.1} parent=0
    #allocation2 [shape = 'u8[2048]{0}', space=vmem, size = 0x800, scoped, tag = 'input window, operand 0, single buffered']
    #allocation3 [shape = 's32[1]{0}', space=sflag, size = 0x4, scoped, tag = 'scoped memory for tpu_custom_call.1']
    #allocation4 [shape = 's32[1]{0}', space=sflag, size = 0x4, scoped, tag = 'scoped memory for tpu_custom_call.1']
    #allocation5 [shape = 'u8[2048]{0}', space=vmem, size = 0x800, scoped, tag = 'output window, operand 0, single buffered']
    %7 = vsyncpa [#allocation3], 0
    %8 = vsyncpa [#allocation4], 0
    // Predicated region
    $region2: #{tpu_custom_call.1} parent=1 // pred_check
      _
    $region3: #{tpu_custom_call.1} parent=1 // pred_check_branch
      %10 = sbr.rel (0) target = $region5
    $region4: #{tpu_custom_call.1} parent=1 // pred_region
      %s12 = ssub.s32 64, 64
      %13 = vsyncadd [#allocation3], %s12
      %s15 = sshll.u32 [#allocation2], 4
      %s16 = int_to_ptr.vmem [resolvable:$true] %s15
      %18 = dma.hbm_to_vmem [thread:$0]  %s0, 64, %s16, [#allocation3]
    $region5: #{tpu_custom_call.1} parent=1 // pred_fallthru
      _
    // Predicated region
    $region6: #{tpu_custom_call.1} parent=1 // pred_check
      _
    $region7: #{tpu_custom_call.1} parent=1 // pred_check_branch
      %20 = sbr.rel (0) target = $region9
    $region8: #{tpu_custom_call.1} parent=1 // pred_region
      _
    $region9: #{tpu_custom_call.1} parent=1 // pred_fallthru
      _
    // Predicated region
    $region10: #{tpu_custom_call.1} parent=1 // pred_check
      _
    $region11: #{tpu_custom_call.1} parent=1 // pred_check_branch
      %22 = sbr.rel (0) target = $region13
    $region12: #{tpu_custom_call.1} parent=1 // pred_region
      %23 = dma.done [#allocation3], 64
    $region13: #{tpu_custom_call.1} parent=1 // pred_fallthru
      _
    %v24 = vld [vmem:[#allocation2] sm:$0xf]
    %v25 = vld [vmem:[%s1] sm:$0x1]
    %v27 = vlaneseq
    %v28 = vshrl.u32 %v27, 7
    %v29 = vsub.s32 0, %v28
    %v30 = vrot.slane %v25, %v29
    %v32 = vmul.f32 %v24, %v30
    %33 = vst [vmem:[#allocation5] sm:$0xf] %v32
    // Predicated region
    $region14: #{tpu_custom_call.1} parent=1 // pred_check
      _
    $region15: #{tpu_custom_call.1} parent=1 // pred_check_branch
      %35 = sbr.rel (0) target = $region17
    $region16: #{tpu_custom_call.1} parent=1 // pred_region
      %s37 = ssub.s32 64, 64
      %38 = vsyncadd [#allocation4], %s37
      %s40 = sshll.u32 [#allocation5], 4
      %s41 = int_to_ptr.vmem [resolvable:$true] %s40
      %43 = dma.vmem_to_hbm [thread:$0]  %s41, 64, %s2, [#allocation4]
    $region17: #{tpu_custom_call.1} parent=1 // pred_fallthru
      _
    // Predicated region
    $region18: #{tpu_custom_call.1} parent=1 // pred_check
      _
    $region19: #{tpu_custom_call.1} parent=1 // pred_check_branch
      %45 = sbr.rel (0) target = $region21
    $region20: #{tpu_custom_call.1} parent=1 // pred_region
      %46 = dma.done [#allocation4], 64
    $region21: #{tpu_custom_call.1} parent=1 // pred_fallthru
      _
    %47 = vsyncpa [#allocation3], 1
    %48 = vsyncpa [#allocation4], 1

</llo_original>
